<compile_context>
chip_gen: v6e
topology: v6e:2x2x1
jax: 0.10.0
libtpu: 0.0.40
codegen_flags: <defaults>
</compile_context>

<pallas_src>
import jax
import jax.numpy as jnp
from jax.experimental import pallas as pl
from jax.experimental.pallas import tpu as pltpu


def _fused_gcn_kernel(a_ref, x_ref, w1_ref, b1_ref, w2_ref, b2_ref, o_ref):
    # Layer 1: feature transform then neighborhood aggregation, fused ReLU.
    xw1 = jnp.dot(x_ref[...], w1_ref[...], preferred_element_type=jnp.float32)
    h = jnp.dot(a_ref[...], xw1, preferred_element_type=jnp.float32) + b1_ref[...]
    h = jnp.maximum(h, 0.0)
    # Layer 2: transform (into the lane-dense padded width) then aggregate.
    hw2 = jnp.dot(h, w2_ref[...], preferred_element_type=jnp.float32)
    out = jnp.dot(a_ref[...], hw2, preferred_element_type=jnp.float32) + b2_ref[...]
    o_ref[...] = out.astype(o_ref.dtype)


def fused_gcn(a_hat, x, w1, b1, w2p, b2p):
    n, f_in = x.shape
    hidden = w1.shape[1]
    c_pad = w2p.shape[1]
    return pl.pallas_call(
        _fused_gcn_kernel,
        out_shape=jax.ShapeDtypeStruct((n, c_pad), jnp.float32),
        grid_spec=pltpu.PrefetchScalarGridSpec(
            num_scalar_prefetch=0,
            grid=(1,),
            in_specs=[
                pl.BlockSpec((n, n), lambda i: (0, 0)),          # A_hat (full)
                pl.BlockSpec((n, f_in), lambda i: (0, 0)),       # X (full)
                pl.BlockSpec((f_in, hidden), lambda i: (0, 0)),  # W1
                pl.BlockSpec((1, hidden), lambda i: (0, 0)),     # b1
                pl.BlockSpec((hidden, c_pad), lambda i: (0, 0)), # W2 (padded)
                pl.BlockSpec((1, c_pad), lambda i: (0, 0)),      # b2 (padded)
            ],
            out_specs=pl.BlockSpec((n, c_pad), lambda i: (0, 0)),
        ),
        compiler_params=pltpu.CompilerParams(
            dimension_semantics=("arbitrary",),
            vmem_limit_bytes=64 << 20,
        ),
    )(a_hat, x, w1, b1, w2p, b2p)


def normalized_adjacency(edge_index, num_nodes):
    """Dense GCN normalization: D^-1/2 (A + I) D^-1/2 (edge weights = 1)."""
    src = edge_index[0]
    dst = edge_index[1]
    a = jnp.zeros((num_nodes, num_nodes), jnp.float32)
    # message flows src -> dst, aggregation is over in-neighbors (rows = dst)
    a = a.at[dst, src].add(1.0)
    a = a + jnp.eye(num_nodes, dtype=jnp.float32)  # add self loops
    deg = jnp.sum(a, axis=1)
    d_inv_sqrt = jnp.where(deg > 0.0, 1.0 / jnp.sqrt(deg), 0.0)
    return d_inv_sqrt[:, None] * a * d_inv_sqrt[None, :]


def glorot(key, shape):
    fan_in, fan_out = shape
    limit = jnp.sqrt(6.0 / (fan_in + fan_out))
    return jax.random.uniform(key, shape, jnp.float32, -limit, limit)


def gnn_forward(x, edge_index, params):
    n = x.shape[0]
    a_hat = normalized_adjacency(edge_index, n)
    w1, b1 = params["w1"], params["b1"]
    w2, b2 = params["w2"], params["b2"]
    hidden = w1.shape[1]
    c = w2.shape[1]
    # Lane-dense output: pad the class dimension up to a multiple of 128 with
    # zero columns so the kernel's stores are full-width; slice afterwards.
    c_pad = max(128, ((c + 127) // 128) * 128)
    w2p = jnp.zeros((hidden, c_pad), jnp.float32).at[:, :c].set(w2)
    b2p = jnp.zeros((1, c_pad), jnp.float32).at[:, :c].set(b2)
    out_p = fused_gcn(a_hat, x, w1, b1, w2p, b2p)
    return out_p[:, :c]


def gnn_forward_ref(x, edge_index, params):
    """Plain-JAX reference for correctness check."""
    n = x.shape[0]
    a_hat = normalized_adjacency(edge_index, n)
    h = jnp.maximum(a_hat @ (x @ params["w1"]) + params["b1"], 0.0)
    return a_hat @ (h @ params["w2"]) + params["b2"]


if __name__ == "__main__":
    # Small, deterministic synthetic graph standing in for the Flickr dataset:
    # N nodes, F input features, 64 hidden units, C output classes.
    N, F, HIDDEN, C = 128, 64, 64, 8
    NUM_EDGES = 512

    key = jax.random.PRNGKey(0)
    k_x, k_src, k_dst, k_w1, k_w2 = jax.random.split(key, 5)

    x = jax.random.normal(k_x, (N, F), jnp.float32)
    src = jax.random.randint(k_src, (NUM_EDGES,), 0, N, jnp.int32)
    dst = jax.random.randint(k_dst, (NUM_EDGES,), 0, N, jnp.int32)
    edge_index = jnp.stack([src, dst], axis=0)  # [2, E]

    params = {
        "w1": glorot(k_w1, (F, HIDDEN)),
        "b1": jnp.zeros((1, HIDDEN), jnp.float32),
        "w2": glorot(k_w2, (HIDDEN, C)),
        "b2": jnp.zeros((1, C), jnp.float32),
    }

    out = jax.block_until_ready(gnn_forward(x, edge_index, params))
    ref = jax.block_until_ready(gnn_forward_ref(x, edge_index, params))

    assert out.shape == (N, C), out.shape
    assert jnp.allclose(out, ref, atol=1e-4, rtol=1e-4), "Pallas kernel mismatch"
    print("KERNEL_OK")
</pallas_src>

<mosaic_0001>
module attributes {stable_mosaic.version = 11 : i64} {
  func.func @_fused_gcn_kernel(%arg0: i32, %arg1: memref<128x128xf32, #tpu.memory_space<vmem>>, %arg2: memref<128x64xf32, #tpu.memory_space<vmem>>, %arg3: memref<64x64xf32, #tpu.memory_space<vmem>>, %arg4: memref<1x64xf32, #tpu.memory_space<vmem>>, %arg5: memref<64x128xf32, #tpu.memory_space<vmem>>, %arg6: memref<1x128xf32, #tpu.memory_space<vmem>>, %arg7: memref<128x128xf32, #tpu.memory_space<vmem>>) attributes {dimension_semantics = [#tpu.dimension_semantics<arbitrary>], iteration_bounds = array<i64: 1>, scalar_prefetch = 0 : i64, scratch_operands = 0 : i64, tpu.core_type = #tpu.core_type<tc>, window_params = [{pipeline_mode = #tpu.pipeline_mode<synchronous>, transform_indices = @transform_0, window_bounds = array<i64: 128, 128>}, {pipeline_mode = #tpu.pipeline_mode<synchronous>, transform_indices = @transform_1, window_bounds = array<i64: 128, 64>}, {pipeline_mode = #tpu.pipeline_mode<synchronous>, transform_indices = @transform_2, window_bounds = array<i64: 64, 64>}, {pipeline_mode = #tpu.pipeline_mode<synchronous>, transform_indices = @transform_3, window_bounds = array<i64: 1, 64>}, {pipeline_mode = #tpu.pipeline_mode<synchronous>, transform_indices = @transform_4, window_bounds = array<i64: 64, 128>}, {pipeline_mode = #tpu.pipeline_mode<synchronous>, transform_indices = @transform_5, window_bounds = array<i64: 1, 128>}, {pipeline_mode = #tpu.pipeline_mode<synchronous>, transform_indices = @transform_6, window_bounds = array<i64: 128, 128>}]} {
    %c0 = arith.constant 0 : index
    %c0_0 = arith.constant 0 : index
    %0 = vector.load %arg2[%c0, %c0_0] : memref<128x64xf32, #tpu.memory_space<vmem>>, vector<128x64xf32>
    %c0_1 = arith.constant 0 : index
    %c0_2 = arith.constant 0 : index
    %1 = vector.load %arg3[%c0_1, %c0_2] : memref<64x64xf32, #tpu.memory_space<vmem>>, vector<64x64xf32>
    %cst = arith.constant dense<0.000000e+00> : vector<128x64xf32>
    %2 = tpu.matmul %0, %1, %cst {dimension_numbers = #tpu.dot_dimension_numbers<[1], [0], [0], [1], [0, 0, 1, 1], [], []>} : vector<128x64xf32>, vector<64x64xf32>, vector<128x64xf32> -> vector<128x64xf32>
    %c0_3 = arith.constant 0 : index
    %c0_4 = arith.constant 0 : index
    %3 = vector.load %arg1[%c0_3, %c0_4] : memref<128x128xf32, #tpu.memory_space<vmem>>, vector<128x128xf32>
    %cst_5 = arith.constant dense<0.000000e+00> : vector<128x64xf32>
    %4 = tpu.matmul %3, %2, %cst_5 {dimension_numbers = #tpu.dot_dimension_numbers<[1], [0], [0], [1], [0, 0, 1, 1], [], []>} : vector<128x128xf32>, vector<128x64xf32>, vector<128x64xf32> -> vector<128x64xf32>
    %c0_6 = arith.constant 0 : index
    %c0_7 = arith.constant 0 : index
    %5 = vector.load %arg4[%c0_6, %c0_7] : memref<1x64xf32, #tpu.memory_space<vmem>>, vector<1x64xf32>
    %6 = vector.broadcast %5 : vector<1x64xf32> to vector<128x64xf32>
    %7 = arith.addf %4, %6 : vector<128x64xf32>
    %cst_8 = arith.constant 0.000000e+00 : f32
    %8 = vector.broadcast %cst_8 : f32 to vector<128x64xf32>
    %9 = arith.maximumf %7, %8 : vector<128x64xf32>
    %c0_9 = arith.constant 0 : index
    %c0_10 = arith.constant 0 : index
    %10 = vector.load %arg5[%c0_9, %c0_10] : memref<64x128xf32, #tpu.memory_space<vmem>>, vector<64x128xf32>
    %cst_11 = arith.constant dense<0.000000e+00> : vector<128x128xf32>
    %11 = tpu.matmul %9, %10, %cst_11 {dimension_numbers = #tpu.dot_dimension_numbers<[1], [0], [0], [1], [0, 0, 1, 1], [], []>} : vector<128x64xf32>, vector<64x128xf32>, vector<128x128xf32> -> vector<128x128xf32>
    %c0_12 = arith.constant 0 : index
    %c0_13 = arith.constant 0 : index
    %12 = vector.load %arg1[%c0_12, %c0_13] : memref<128x128xf32, #tpu.memory_space<vmem>>, vector<128x128xf32>
    %cst_14 = arith.constant dense<0.000000e+00> : vector<128x128xf32>
    %13 = tpu.matmul %12, %11, %cst_14 {dimension_numbers = #tpu.dot_dimension_numbers<[1], [0], [0], [1], [0, 0, 1, 1], [], []>} : vector<128x128xf32>, vector<128x128xf32>, vector<128x128xf32> -> vector<128x128xf32>
    %c0_15 = arith.constant 0 : index
    %c0_16 = arith.constant 0 : index
    %14 = vector.load %arg6[%c0_15, %c0_16] : memref<1x128xf32, #tpu.memory_space<vmem>>, vector<1x128xf32>
    %15 = vector.broadcast %14 : vector<1x128xf32> to vector<128x128xf32>
    %16 = arith.addf %13, %15 : vector<128x128xf32>
    %c0_17 = arith.constant 0 : index
    %c0_18 = arith.constant 0 : index
    %17 = vector.load %arg7[%c0_17, %c0_18] : memref<128x128xf32, #tpu.memory_space<vmem>>, vector<128x128xf32>
    tpu.vector_store %arg7[%c0_17, %c0_18], %16 {strides = array<i32>} : memref<128x128xf32, #tpu.memory_space<vmem>>, vector<128x128xf32>,
    return
  }
  func.func @transform_0(%arg0: i32) -> (i32, i32) {
    %c0_i32 = arith.constant 0 : i32
    %c0_i32_0 = arith.constant 0 : i32
    %c0_i32_1 = arith.constant 0 : i32
    return %c0_i32, %c0_i32_0 : i32, i32
  }
  func.func @transform_1(%arg0: i32) -> (i32, i32) {
    %c0_i32 = arith.constant 0 : i32
    %c0_i32_0 = arith.constant 0 : i32
    %c0_i32_1 = arith.constant 0 : i32
    return %c0_i32, %c0_i32_0 : i32, i32
  }
  func.func @transform_2(%arg0: i32) -> (i32, i32) {
    %c0_i32 = arith.constant 0 : i32
    %c0_i32_0 = arith.constant 0 : i32
    %c0_i32_1 = arith.constant 0 : i32
    return %c0_i32, %c0_i32_0 : i32, i32
  }
  func.func @transform_3(%arg0: i32) -> (i32, i32) {
    %c0_i32 = arith.constant 0 : i32
    %c0_i32_0 = arith.constant 0 : i32
    %c0_i32_1 = arith.constant 0 : i32
    return %c0_i32, %c0_i32_0 : i32, i32
  }
  func.func @transform_4(%arg0: i32) -> (i32, i32) {
    %c0_i32 = arith.constant 0 : i32
    %c0_i32_0 = arith.constant 0 : i32
    %c0_i32_1 = arith.constant 0 : i32
    return %c0_i32, %c0_i32_0 : i32, i32
  }
  func.func @transform_5(%arg0: i32) -> (i32, i32) {
    %c0_i32 = arith.constant 0 : i32
    %c0_i32_0 = arith.constant 0 : i32
    %c0_i32_1 = arith.constant 0 : i32
    return %c0_i32, %c0_i32_0 : i32, i32
  }
  func.func @transform_6(%arg0: i32) -> (i32, i32) {
    %c0_i32 = arith.constant 0 : i32
    %c0_i32_0 = arith.constant 0 : i32
    %c0_i32_1 = arith.constant 0 : i32
    return %c0_i32, %c0_i32_0 : i32, i32
  }
}

</mosaic_0001>

<llo_original>
// kernel: tpu_custom_call.1
$region0: #{tpu_custom_call.1}
  #allocation0 [shape = 'u32[]', space=smem, size = 0x4, offset = 0x4, fixed_abs, tag = 'smem constant byte address 0x4 - core index']
  #allocation1 [shape = 'u32[144,128]{1,0:T(1,128)}', space=vmem, size = 0x12000, scoped, tag = 'internal scratch']
  %s0 = inlined_call_operand.vmem [shape: f32[128,128], index: 0, kind: input, shape index: {}]
  %s1 = inlined_call_operand.vmem [shape: f32[128,64], index: 1, kind: input, shape index: {}]
  %s2 = inlined_call_operand.vmem [shape: f32[64,64], index: 2, kind: input, shape index: {}]
  %s3 = inlined_call_operand.vmem [shape: f32[1,64], index: 3, kind: input, shape index: {}]
  %s4 = inlined_call_operand.hbm [shape: f32[64,128], index: 4, kind: input, shape index: {}]
  %s5 = inlined_call_operand.vmem [shape: f32[1,128], index: 5, kind: input, shape index: {}]
  %s6 = inlined_call_operand.hbm [shape: f32[128,128], index: 6, kind: output, shape index: {}]
  %s7 = sld [smem:[#allocation0]]
  $region38: #{tpu_custom_call.1} parent=0
    _
  %s9 = ssub.s32 1, %s7
  %s10 = scalar_select 0, %s9, %s7
  $region1: #{tpu_custom_call.1} parent=0
    #allocation2 [shape = 'u8[32768]{0}', space=vmem, size = 0x8000, scoped, tag = 'input window, operand 4, single buffered']
    #allocation3 [shape = 's32[1]{0}', space=sflag, size = 0x4, scoped, tag = 'scoped memory for tpu_custom_call.1']
    #allocation4 [shape = 's32[1]{0}', space=sflag, size = 0x4, scoped, tag = 'scoped memory for tpu_custom_call.1']
    #allocation5 [shape = 'u8[65536]{0}', space=vmem, size = 0x10000, scoped, tag = 'output window, operand 0, single buffered']
    %11 = vsyncpa [#allocation3], 0
    %12 = vsyncpa [#allocation4], 0
    // Predicated region
    $region2: #{tpu_custom_call.1} parent=1 // pred_check
      _
    $region3: #{tpu_custom_call.1} parent=1 // pred_check_branch
      %14 = sbr.rel (0) target = $region5
    $region4: #{tpu_custom_call.1} parent=1 // pred_region
      _
    $region5: #{tpu_custom_call.1} parent=1 // pred_fallthru
      _
    // Predicated region
    $region6: #{tpu_custom_call.1} parent=1 // pred_check
      _
    $region7: #{tpu_custom_call.1} parent=1 // pred_check_branch
      %16 = sbr.rel (0) target = $region9
    $region8: #{tpu_custom_call.1} parent=1 // pred_region
      _
    $region9: #{tpu_custom_call.1} parent=1 // pred_fallthru
      _
    // Predicated region
    $region10: #{tpu_custom_call.1} parent=1 // pred_check
      _
    $region11: #{tpu_custom_call.1} parent=1 // pred_check_branch
      %18 = sbr.rel (0) target = $region13
    $region12: #{tpu_custom_call.1} parent=1 // pred_region
      _
    $region13: #{tpu_custom_call.1} parent=1 // pred_fallthru
      _
    // Predicated region
    $region14: #{tpu_custom_call.1} parent=1 // pred_check
      _
    $region15: #{tpu_custom_call.1} parent=1 // pred_check_branch
      %20 = sbr.rel (0) target = $region17
    $region16: #{tpu_custom_call.1} parent=1 // pred_region
      _
    $region17: #{tpu_custom_call.1} parent=1 // pred_fallthru
      _
    // Predicated region
    $region18: #{tpu_custom_call.1} parent=1 // pred_check
      _
    $region19: #{tpu_custom_call.1} parent=1 // pred_check_branch
      %22 = sbr.rel (0) target = $region21
    $region20: #{tpu_custom_call.1} parent=1 // pred_region
      %s24 = ssub.s32 1024, 1024
      %25 = vsyncadd [#allocation3], %s24
      %s26 = sshll.u32 [#allocation2], 4
      %s27 = int_to_ptr.vmem [resolvable:$true] %s26
      %32 = dma.hbm_to_vmem [thread:$0]  %s4, 1024, %s27, [#allocation3], 128, 128, 8
    $region21: #{tpu_custom_call.1} parent=1 // pred_fallthru
      _
    // Predicated region
    $region22: #{tpu_custom_call.1} parent=1 // pred_check
      _
    $region23: #{tpu_custom_call.1} parent=1 // pred_check_branch
      %34 = sbr.rel (0) target = $region25
    $region24: #{tpu_custom_call.1} parent=1 // pred_region
      _
    $region25: #{tpu_custom_call.1} parent=1 // pred_fallthru
      _
    // Predicated region
    $region26: #{tpu_custom_call.1} parent=1 // pred_check
      _
    $region27: #{tpu_custom_call.1} parent=1 // pred_check_branch
      %36 = sbr.rel (0) target = $region29
    $region28: #{tpu_custom_call.1} parent=1 // pred_region
      %37 = dma.done [#allocation3], 1024
    $region29: #{tpu_custom_call.1} parent=1 // pred_fallthru
      _
    %v38 = vld [vmem:[%s1] sm:$0xff]
    %v39 = vld [vmem:[%s1 + $0x8] sm:$0xff]
    %v40 = vld [vmem:[%s1 + $0x10] sm:$0xff]
    %v41 = vld [vmem:[%s1 + $0x18] sm:$0xff]
    %v42 = vld [vmem:[%s1 + $0x20] sm:$0xff]
    %v43 = vld [vmem:[%s1 + $0x28] sm:$0xff]
    %v44 = vld [vmem:[%s1 + $0x30] sm:$0xff]
    %v45 = vld [vmem:[%s1 + $0x38] sm:$0xff]
    %v46 = vld [vmem:[%s1 + $0x40] sm:$0xff]
    %v47 = vld [vmem:[%s1 + $0x48] sm:$0xff]
    %v48 = vld [vmem:[%s1 + $0x50] sm:$0xff]
    %v49 = vld [vmem:[%s1 + $0x58] sm:$0xff]
    %v50 = vld [vmem:[%s1 + $0x60] sm:$0xff]
    %v51 = vld [vmem:[%s1 + $0x68] sm:$0xff]
    %v52 = vld [vmem:[%s1 + $0x70] sm:$0xff]
    %v53 = vld [vmem:[%s1 + $0x78] sm:$0xff]
    %v54 = vld [vmem:[%s2] sm:$0xff]
    %v55 = vld [vmem:[%s2 + $0x8] sm:$0xff]
    %v56 = vld [vmem:[%s2 + $0x10] sm:$0xff]
    %v57 = vld [vmem:[%s2 + $0x18] sm:$0xff]
    %v58 = vld [vmem:[%s2 + $0x20] sm:$0xff]
    %v59 = vld [vmem:[%s2 + $0x28] sm:$0xff]
    %v60 = vld [vmem:[%s2 + $0x30] sm:$0xff]
    %v61 = vld [vmem:[%s2 + $0x38] sm:$0xff]
    %vm62 = vcmask 523264
    %v64 = vsel %vm62, %v38, 0
    %v67 = vsel %vm62, %v39, 0
    %v70 = vsel %vm62, %v40, 0
    %v73 = vsel %vm62, %v41, 0
    %v76 = vsel %vm62, %v42, 0
    %v79 = vsel %vm62, %v43, 0
    %v82 = vsel %vm62, %v44, 0
    %v85 = vsel %vm62, %v45, 0
    %v88 = vsel %vm62, %v46, 0
    %v91 = vsel %vm62, %v47, 0
    %v94 = vsel %vm62, %v48, 0
    %v97 = vsel %vm62, %v49, 0
    %v100 = vsel %vm62, %v50, 0
    %v103 = vsel %vm62, %v51, 0
    %v106 = vsel %vm62, %v52, 0
    %v109 = vsel %vm62, %v53, 0
    %111 = vmatprep.subr.mxu0 0.0
    %112 = vmatpush1.msra.mxu0 0.0
    %113 = vmatprep.subr.mxu0 0.0
    %114 = vmatpush1.msra.mxu0 0.0
    %115 = vmatprep.subr.mxu0 0.0
    %116 = vmatpush1.msra.mxu0 0.0
    %117 = vmatprep.subr.mxu0 0.0
    %118 = vmatpush1.msra.mxu0 0.0
    %119 = vmatprep.subr.mxu0 0.0
    %120 = vmatpush1.msra.mxu0 0.0
    %121 = vmatprep.subr.mxu0 0.0
    %122 = vmatpush1.msra.mxu0 0.0
    %123 = vmatprep.subr.mxu0 0.0
    %124 = vmatpush1.msra.mxu0 0.0
    %125 = vmatprep.subr.mxu0 0.0
    %126 = vmatpush1.msra.mxu0 0.0
    %127 = vmatprep.subr.mxu0 0.0
    %128 = vmatpush1.msra.mxu0 %v61
    %129 = vmatprep.subr.mxu0 0.0
    %130 = vmatpush1.msra.mxu0 %v60
    %131 = vmatprep.subr.mxu0 0.0
    %132 = vmatpush1.msra.mxu0 %v59
    %133 = vmatprep.subr.mxu0 0.0
    %134 = vmatpush1.msra.mxu0 %v58
    %135 = vmatprep.subr.mxu0 0.0
    %136 = vmatpush1.msra.mxu0 %v57
    %137 = vmatprep.subr.mxu0 0.0
    %138 = vmatpush1.msra.mxu0 %v56
    %139 = vmatprep.subr.mxu0 0.0
    %140 = vmatpush1.msra.mxu0 %v55
    %141 = vmatprep.subr.mxu0 0.0
    %142 = vmatpush1.msra.mxu0 %v54
    %143 = vmatprep.subr.mxu0 0.0
    %144 = vmatpush2.msra.mxu0 0.0
    %145 = vmatprep.subr.mxu0 0.0
    %146 = vmatpush2.msra.mxu0 0.0
    %147 = vmatprep.subr.mxu0 0.0
    %148 = vmatpush2.msra.mxu0 0.0
    %149 = vmatprep.subr.mxu0 0.0
    %150 = vmatpush2.msra.mxu0 0.0
    %151 = vmatprep.subr.mxu0 0.0
    %152 = vmatpush2.msra.mxu0 0.0
    %153 = vmatprep.subr.mxu0 0.0
    %154 = vmatpush2.msra.mxu0 0.0
    %155 = vmatprep.subr.mxu0 0.0
    %156 = vmatpush2.msra.mxu0 0.0
    %157 = vmatprep.subr.mxu0 0.0
    %158 = vmatpush2.msra.mxu0 0.0
    %159 = vmatprep.subr.mxu0 0.0
    %160 = vmatpush2.msra.mxu0 0.0
    %161 = vmatprep.subr.mxu0 0.0
    %162 = vmatpush2.msra.mxu0 0.0
    %163 = vmatprep.subr.mxu0 0.0
    %164 = vmatpush2.msra.mxu0 0.0
    %165 = vmatprep.subr.mxu0 0.0
    %166 = vmatpush2.msra.mxu0 0.0
    %167 = vmatprep.subr.mxu0 0.0
    %168 = vmatpush2.msra.mxu0 0.0
    %169 = vmatprep.subr.mxu0 0.0
    %170 = vmatpush2.msra.mxu0 0.0
    %171 = vmatprep.subr.mxu0 0.0
    %172 = vmatpush2.msra.mxu0 0.0
    %173 = vmatprep.subr.mxu0 0.0
    %174 = vmatpush2.msra.mxu0 0.0
    %175 = vmatprep.mubr.f32.mxu0 0.0
    %176 = vmatmul.mubr.f32.gmra.mxu0 %v64
    %v177 = vpop.f32.mrf.mxu0
    %v178 = vadd.f32 0.0, %v177
    %v179 = vpop.f32.mrf.mxu0
    %180 = vmatprep.mubr.f32.mxu0 0.0
    %181 = vmatmul.mubr.f32.gmra.mxu0 %v67
    %v182 = vpop.f32.mrf.mxu0
    %v183 = vadd.f32 0.0, %v182
    %v184 = vpop.f32.mrf.mxu0
    %185 = vmatprep.mubr.f32.mxu0 0.0
    %186 = vmatmul.mubr.f32.gmra.mxu0 %v70
    %v187 = vpop.f32.mrf.mxu0
    %v188 = vadd.f32 0.0, %v187
    %v189 = vpop.f32.mrf.mxu0
    %190 = vmatprep.mubr.f32.mxu0 0.0
    %191 = vmatmul.mubr.f32.gmra.mxu0 %v73
    %v192 = vpop.f32.mrf.mxu0
    %v193 = vadd.f32 0.0, %v192
    %v194 = vpop.f32.mrf.mxu0
    %195 = vmatprep.mubr.f32.mxu0 0.0
    %196 = vmatmul.mubr.f32.gmra.mxu0 %v76
    %v197 = vpop.f32.mrf.mxu0
    %v198 = vadd.f32 0.0, %v197
    %v199 = vpop.f32.mrf.mxu0
    %200 = vmatprep.mubr.f32.mxu0 0.0
    %201 = vmatmul.mubr.f32.gmra.mxu0 %v79
    %v202 = vpop.f32.mrf.mxu0
    %v203 = vadd.f32 0.0, %v202
    %v204 = vpop.f32.mrf.mxu0
    %205 = vmatprep.mubr.f32.mxu0 0.0
    %206 = vmatmul.mubr.f32.gmra.mxu0 %v82
    %v207 = vpop.f32.mrf.mxu0
    %v208 = vadd.f32 0.0, %v207
    %v209 = vpop.f32.mrf.mxu0
    %210 = vmatprep.mubr.f32.mxu0 0.0
    %211 = vmatmul.mubr.f32.gmra.mxu0 %v85
    %v212 = vpop.f32.mrf.mxu0
    %v213 = vadd.f32 0.0, %v212
    %v214 = vpop.f32.mrf.mxu0
    %215 = vmatprep.mubr.f32.mxu0 0.0
    %216 = vmatmul.mubr.f32.gmra.mxu0 %v88
    %v217 = vpop.f32.mrf.mxu0
    %v218 = vadd.f32 0.0, %v217
    %v219 = vpop.f32.mrf.mxu0
    %220 = vmatprep.mubr.f32.mxu0 0.0
    %221 = vmatmul.mubr.f32.gmra.mxu0 %v91
    %v222 = vpop.f32.mrf.mxu0
    %v223 = vadd.f32 0.0, %v222
    %v224 = vpop.f32.mrf.mxu0
    %225 = vmatprep.mubr.f32.mxu0 0.0
    %226 = vmatmul.mubr.f32.gmra.mxu0 %v94
    %v227 = vpop.f32.mrf.mxu0
    %v228 = vadd.f32 0.0, %v227
    %v229 = vpop.f32.mrf.mxu0
    %230 = vmatprep.mubr.f32.mxu0 0.0
    %231 = vmatmul.mubr.f32.gmra.mxu0 %v97
    %v232 = vpop.f32.mrf.mxu0
    %v233 = vadd.f32 0.0, %v232
    %v234 = vpop.f32.mrf.mxu0
    %235 = vmatprep.mubr.f32.mxu0 0.0
    %236 = vmatmul.mubr.f32.gmra.mxu0 %v100
    %v237 = vpop.f32.mrf.mxu0
    %v238 = vadd.f32 0.0, %v237
    %v239 = vpop.f32.mrf.mxu0
    %240 = vmatprep.mubr.f32.mxu0 0.0
    %241 = vmatmul.mubr.f32.gmra.mxu0 %v103
    %v242 = vpop.f32.mrf.mxu0
    %v243 = vadd.f32 0.0, %v242
    %v244 = vpop.f32.mrf.mxu0
    %245 = vmatprep.mubr.f32.mxu0 0.0
    %246 = vmatmul.mubr.f32.gmra.mxu0 %v106
    %v247 = vpop.f32.mrf.mxu0
    %v248 = vadd.f32 0.0, %v247
    %v249 = vpop.f32.mrf.mxu0
    %250 = vmatprep.mubr.f32.mxu0 0.0
    %251 = vmatmul.mubr.f32.gmra.mxu0 %v109
    %v252 = vpop.f32.mrf.mxu0
    %v253 = vadd.f32 0.0, %v252
    %v254 = vpop.f32.mrf.mxu0
    %255 = vdwg.mxu0
    %v256 = vld [vmem:[%s0] sm:$0xff]
    %v257 = vld [vmem:[%s0 + $0x8] sm:$0xff]
    %v258 = vld [vmem:[%s0 + $0x10] sm:$0xff]
    %v259 = vld [vmem:[%s0 + $0x18] sm:$0xff]
    %v260 = vld [vmem:[%s0 + $0x20] sm:$0xff]
    %v261 = vld [vmem:[%s0 + $0x28] sm:$0xff]
    %v262 = vld [vmem:[%s0 + $0x30] sm:$0xff]
    %v263 = vld [vmem:[%s0 + $0x38] sm:$0xff]
    %v264 = vld [vmem:[%s0 + $0x40] sm:$0xff]
    %v265 = vld [vmem:[%s0 + $0x48] sm:$0xff]
    %v266 = vld [vmem:[%s0 + $0x50] sm:$0xff]
    %v267 = vld [vmem:[%s0 + $0x58] sm:$0xff]
    %v268 = vld [vmem:[%s0 + $0x60] sm:$0xff]
    %v269 = vld [vmem:[%s0 + $0x68] sm:$0xff]
    %v270 = vld [vmem:[%s0 + $0x70] sm:$0xff]
    %v271 = vld [vmem:[%s0 + $0x78] sm:$0xff]
    %v272 = vld [vmem:[%s3] sm:$0x1]
    %v274 = vlaneseq
    %v275 = vshrl.u32 %v274, 7
    %v276 = vsub.s32 0, %v275
    %v277 = vrot.slane %v272, %v276
    %279 = vmatprep.subr.mxu0 0.0
    %280 = vmatpush1.msra.mxu0 %v253
    %281 = vmatprep.subr.mxu0 0.0
    %282 = vmatpush1.msra.mxu0 %v248
    %283 = vmatprep.subr.mxu0 0.0
    %284 = vmatpush1.msra.mxu0 %v243
    %285 = vmatprep.subr.mxu0 0.0
    %286 = vmatpush1.msra.mxu0 %v238
    %287 = vmatprep.subr.mxu0 0.0
    %288 = vmatpush1.msra.mxu0 %v233
    %289 = vmatprep.subr.mxu0 0.0
    %290 = vmatpush1.msra.mxu0 %v228
    %291 = vmatprep.subr.mxu0 0.0
    %292 = vmatpush1.msra.mxu0 %v223
    %293 = vmatprep.subr.mxu0 0.0
    %294 = vmatpush1.msra.mxu0 %v218
    %295 = vmatprep.subr.mxu0 0.0
    %296 = vmatpush1.msra.mxu0 %v213
    %297 = vmatprep.subr.mxu0 0.0
    %298 = vmatpush1.msra.mxu0 %v208
    %299 = vmatprep.subr.mxu0 0.0
    %300 = vmatpush1.msra.mxu0 %v203
    %301 = vmatprep.subr.mxu0 0.0
    %302 = vmatpush1.msra.mxu0 %v198
    %303 = vmatprep.subr.mxu0 0.0
    %304 = vmatpush1.msra.mxu0 %v193
    %305 = vmatprep.subr.mxu0 0.0
    %306 = vmatpush1.msra.mxu0 %v188
    %307 = vmatprep.subr.mxu0 0.0
    %308 = vmatpush1.msra.mxu0 %v183
    %309 = vmatprep.subr.mxu0 0.0
    %310 = vmatpush1.msra.mxu0 %v178
    %311 = vmatprep.subr.mxu0 0.0
    %312 = vmatpush2.msra.mxu0 0.0
    %313 = vmatprep.subr.mxu0 0.0
    %314 = vmatpush2.msra.mxu0 0.0
    %315 = vmatprep.subr.mxu0 0.0
    %316 = vmatpush2.msra.mxu0 0.0
    %317 = vmatprep.subr.mxu0 0.0
    %318 = vmatpush2.msra.mxu0 0.0
    %319 = vmatprep.subr.mxu0 0.0
    %320 = vmatpush2.msra.mxu0 0.0
    %321 = vmatprep.subr.mxu0 0.0
    %322 = vmatpush2.msra.mxu0 0.0
    %323 = vmatprep.subr.mxu0 0.0
    %324 = vmatpush2.msra.mxu0 0.0
    %325 = vmatprep.subr.mxu0 0.0
    %326 = vmatpush2.msra.mxu0 0.0
    %327 = vmatprep.subr.mxu0 0.0
    %328 = vmatpush2.msra.mxu0 0.0
    %329 = vmatprep.subr.mxu0 0.0
    %330 = vmatpush2.msra.mxu0 0.0
    %331 = vmatprep.subr.mxu0 0.0
    %332 = vmatpush2.msra.mxu0 0.0
    %333 = vmatprep.subr.mxu0 0.0
    %334 = vmatpush2.msra.mxu0 0.0
    %335 = vmatprep.subr.mxu0 0.0
    %336 = vmatpush2.msra.mxu0 0.0
    %337 = vmatprep.subr.mxu0 0.0
    %338 = vmatpush2.msra.mxu0 0.0
    %339 = vmatprep.subr.mxu0 0.0
    %340 = vmatpush2.msra.mxu0 0.0
    %341 = vmatprep.subr.mxu0 0.0
    %342 = vmatpush2.msra.mxu0 0.0
    %343 = vmatprep.mubr.f32.mxu0 0.0
    %344 = vmatmul.mubr.f32.gmra.mxu0 %v256
    %v345 = vpop.f32.mrf.mxu0
    %v346 = vadd.f32 %v277, %v345
    %v347 = vpop.f32.mrf.mxu0
    %348 = vmatprep.mubr.f32.mxu0 0.0
    %349 = vmatmul.mubr.f32.gmra.mxu0 %v257
    %v350 = vpop.f32.mrf.mxu0
    %v351 = vadd.f32 %v277, %v350
    %v352 = vpop.f32.mrf.mxu0
    %353 = vmatprep.mubr.f32.mxu0 0.0
    %354 = vmatmul.mubr.f32.gmra.mxu0 %v258
    %v355 = vpop.f32.mrf.mxu0
    %v356 = vadd.f32 %v277, %v355
    %v357 = vpop.f32.mrf.mxu0
    %358 = vmatprep.mubr.f32.mxu0 0.0
    %359 = vmatmul.mubr.f32.gmra.mxu0 %v259
    %v360 = vpop.f32.mrf.mxu0
    %v361 = vadd.f32 %v277, %v360
    %v362 = vpop.f32.mrf.mxu0
    %363 = vmatprep.mubr.f32.mxu0 0.0
    %364 = vmatmul.mubr.f32.gmra.mxu0 %v260
    %v365 = vpop.f32.mrf.mxu0
    %v366 = vadd.f32 %v277, %v365
    %v367 = vpop.f32.mrf.mxu0
    %368 = vmatprep.mubr.f32.mxu0 0.0
    %369 = vmatmul.mubr.f32.gmra.mxu0 %v261
    %v370 = vpop.f32.mrf.mxu0
    %v371 = vadd.f32 %v277, %v370
    %v372 = vpop.f32.mrf.mxu0
    %373 = vmatprep.mubr.f32.mxu0 0.0
    %374 = vmatmul.mubr.f32.gmra.mxu0 %v262
    %v375 = vpop.f32.mrf.mxu0
    %v376 = vadd.f32 %v277, %v375
    %v377 = vpop.f32.mrf.mxu0
    %378 = vmatprep.mubr.f32.mxu0 0.0
    %379 = vmatmul.mubr.f32.gmra.mxu0 %v263
    %v380 = vpop.f32.mrf.mxu0
    %v381 = vadd.f32 %v277, %v380
    %v382 = vpop.f32.mrf.mxu0
    %383 = vmatprep.mubr.f32.mxu0 0.0
    %384 = vmatmul.mubr.f32.gmra.mxu0 %v264
    %v385 = vpop.f32.mrf.mxu0
    %v386 = vadd.f32 %v277, %v385
    %v387 = vpop.f32.mrf.mxu0
    %388 = vmatprep.mubr.f32.mxu0 0.0
    %389 = vmatmul.mubr.f32.gmra.mxu0 %v265
    %v390 = vpop.f32.mrf.mxu0
    %v391 = vadd.f32 %v277, %v390
    %v392 = vpop.f32.mrf.mxu0
    %393 = vmatprep.mubr.f32.mxu0 0.0
    %394 = vmatmul.mubr.f32.gmra.mxu0 %v266
    %v395 = vpop.f32.mrf.mxu0
    %v396 = vadd.f32 %v277, %v395
    %v397 = vpop.f32.mrf.mxu0
    %398 = vmatprep.mubr.f32.mxu0 0.0
    %399 = vmatmul.mubr.f32.gmra.mxu0 %v267
    %v400 = vpop.f32.mrf.mxu0
    %v401 = vadd.f32 %v277, %v400
    %v402 = vpop.f32.mrf.mxu0
    %403 = vmatprep.mubr.f32.mxu0 0.0
    %404 = vmatmul.mubr.f32.gmra.mxu0 %v268
    %v405 = vpop.f32.mrf.mxu0
    %v406 = vadd.f32 %v277, %v405
    %v407 = vpop.f32.mrf.mxu0
    %408 = vmatprep.mubr.f32.mxu0 0.0
    %409 = vmatmul.mubr.f32.gmra.mxu0 %v269
    %v410 = vpop.f32.mrf.mxu0
    %v411 = vadd.f32 %v277, %v410
    %v412 = vpop.f32.mrf.mxu0
    %413 = vmatprep.mubr.f32.mxu0 0.0
    %414 = vmatmul.mubr.f32.gmra.mxu0 %v270
    %v415 = vpop.f32.mrf.mxu0
    %v416 = vadd.f32 %v277, %v415
    %v417 = vpop.f32.mrf.mxu0
    %418 = vmatprep.mubr.f32.mxu0 0.0
    %419 = vmatmul.mubr.f32.gmra.mxu0 %v271
    %v420 = vpop.f32.mrf.mxu0
    %v421 = vadd.f32 %v277, %v420
    %v422 = vpop.f32.mrf.mxu0
    %423 = vdwg.mxu0
    %v424 = vmax.f32 %v346, 0.0
    %v425 = vmax.f32 %v351, 0.0
    %v426 = vmax.f32 %v356, 0.0
    %v427 = vmax.f32 %v361, 0.0
    %v428 = vmax.f32 %v366, 0.0
    %v429 = vmax.f32 %v371, 0.0
    %v430 = vmax.f32 %v376, 0.0
    %v431 = vmax.f32 %v381, 0.0
    %v432 = vmax.f32 %v386, 0.0
    %v433 = vmax.f32 %v391, 0.0
    %v434 = vmax.f32 %v396, 0.0
    %v435 = vmax.f32 %v401, 0.0
    %v436 = vmax.f32 %v406, 0.0
    %v437 = vmax.f32 %v411, 0.0
    %v438 = vmax.f32 %v416, 0.0
    %v439 = vmax.f32 %v421, 0.0
    %v440 = vld [vmem:[#allocation2] sm:$0xff]
    %v441 = vld [vmem:[#allocation2 + $0x8] sm:$0xff]
    %v442 = vld [vmem:[#allocation2 + $0x10] sm:$0xff]
    %v443 = vld [vmem:[#allocation2 + $0x18] sm:$0xff]
    %v444 = vld [vmem:[#allocation2 + $0x20] sm:$0xff]
    %v445 = vld [vmem:[#allocation2 + $0x28] sm:$0xff]
    %v446 = vld [vmem:[#allocation2 + $0x30] sm:$0xff]
    %v447 = vld [vmem:[#allocation2 + $0x38] sm:$0xff]
    %v449 = vsel %vm62, %v424, 0
    %v452 = vsel %vm62, %v425, 0
    %v455 = vsel %vm62, %v426, 0
    %v458 = vsel %vm62, %v427, 0
    %v461 = vsel %vm62, %v428, 0
    %v464 = vsel %vm62, %v429, 0
    %v467 = vsel %vm62, %v430, 0
    %v470 = vsel %vm62, %v431, 0
    %v473 = vsel %vm62, %v432, 0
    %v476 = vsel %vm62, %v433, 0
    %v479 = vsel %vm62, %v434, 0
    %v482 = vsel %vm62, %v435, 0
    %v485 = vsel %vm62, %v436, 0
    %v488 = vsel %vm62, %v437, 0
    %v491 = vsel %vm62, %v438, 0
    %v494 = vsel %vm62, %v439, 0
    %496 = vmatprep.subr.mxu0 0.0
    %497 = vmatpush1.msra.mxu0 0.0
    %498 = vmatprep.subr.mxu0 0.0
    %499 = vmatpush1.msra.mxu0 0.0
    %500 = vmatprep.subr.mxu0 0.0
    %501 = vmatpush1.msra.mxu0 0.0
    %502 = vmatprep.subr.mxu0 0.0
    %503 = vmatpush1.msra.mxu0 0.0
    %504 = vmatprep.subr.mxu0 0.0
    %505 = vmatpush1.msra.mxu0 0.0
    %506 = vmatprep.subr.mxu0 0.0
    %507 = vmatpush1.msra.mxu0 0.0
    %508 = vmatprep.subr.mxu0 0.0
    %509 = vmatpush1.msra.mxu0 0.0
    %510 = vmatprep.subr.mxu0 0.0
    %511 = vmatpush1.msra.mxu0 0.0
    %512 = vmatprep.subr.mxu0 0.0
    %513 = vmatpush1.msra.mxu0 %v447
    %514 = vmatprep.subr.mxu0 0.0
    %515 = vmatpush1.msra.mxu0 %v446
    %516 = vmatprep.subr.mxu0 0.0
    %517 = vmatpush1.msra.mxu0 %v445
    %518 = vmatprep.subr.mxu0 0.0
    %519 = vmatpush1.msra.mxu0 %v444
    %520 = vmatprep.subr.mxu0 0.0
    %521 = vmatpush1.msra.mxu0 %v443
    %522 = vmatprep.subr.mxu0 0.0
    %523 = vmatpush1.msra.mxu0 %v442
    %524 = vmatprep.subr.mxu0 0.0
    %525 = vmatpush1.msra.mxu0 %v441
    %526 = vmatprep.subr.mxu0 0.0
    %527 = vmatpush1.msra.mxu0 %v440
    %528 = vmatprep.subr.mxu0 0.0
    %529 = vmatpush2.msra.mxu0 0.0
    %530 = vmatprep.subr.mxu0 0.0
    %531 = vmatpush2.msra.mxu0 0.0
    %532 = vmatprep.subr.mxu0 0.0
    %533 = vmatpush2.msra.mxu0 0.0
    %534 = vmatprep.subr.mxu0 0.0
    %535 = vmatpush2.msra.mxu0 0.0
    %536 = vmatprep.subr.mxu0 0.0
    %537 = vmatpush2.msra.mxu0 0.0
    %538 = vmatprep.subr.mxu0 0.0
    %539 = vmatpush2.msra.mxu0 0.0
    %540 = vmatprep.subr.mxu0 0.0
    %541 = vmatpush2.msra.mxu0 0.0
    %542 = vmatprep.subr.mxu0 0.0
    %543 = vmatpush2.msra.mxu0 0.0
    %544 = vmatprep.subr.mxu0 0.0
    %545 = vmatpush2.msra.mxu0 0.0
    %546 = vmatprep.subr.mxu0 0.0
    %547 = vmatpush2.msra.mxu0 0.0
    %548 = vmatprep.subr.mxu0 0.0
    %549 = vmatpush2.msra.mxu0 0.0
    %550 = vmatprep.subr.mxu0 0.0
    %551 = vmatpush2.msra.mxu0 0.0
    %552 = vmatprep.subr.mxu0 0.0
    %553 = vmatpush2.msra.mxu0 0.0
    %554 = vmatprep.subr.mxu0 0.0
    %555 = vmatpush2.msra.mxu0 0.0
    %556 = vmatprep.subr.mxu0 0.0
    %557 = vmatpush2.msra.mxu0 0.0
    %558 = vmatprep.subr.mxu0 0.0
    %559 = vmatpush2.msra.mxu0 0.0
    %560 = vmatprep.mubr.f32.mxu0 0.0
    %561 = vmatmul.mubr.f32.gmra.mxu0 %v449
    %v562 = vpop.f32.mrf.mxu0
    %v563 = vadd.f32 0.0, %v562
    %v564 = vpop.f32.mrf.mxu0
    %565 = vmatprep.mubr.f32.mxu0 0.0
    %566 = vmatmul.mubr.f32.gmra.mxu0 %v452
    %v567 = vpop.f32.mrf.mxu0
    %v568 = vadd.f32 0.0, %v567
    %v569 = vpop.f32.mrf.mxu0
    %570 = vmatprep.mubr.f32.mxu0 0.0
    %571 = vmatmul.mubr.f32.gmra.mxu0 %v455
    %v572 = vpop.f32.mrf.mxu0
    %v573 = vadd.f32 0.0, %v572
    %v574 = vpop.f32.mrf.mxu0
    %575 = vmatprep.mubr.f32.mxu0 0.0
    %576 = vmatmul.mubr.f32.gmra.mxu0 %v458
    %v577 = vpop.f32.mrf.mxu0
    %v578 = vadd.f32 0.0, %v577
    %v579 = vpop.f32.mrf.mxu0
    %580 = vmatprep.mubr.f32.mxu0 0.0
    %581 = vmatmul.mubr.f32.gmra.mxu0 %v461
    %v582 = vpop.f32.mrf.mxu0
    %v583 = vadd.f32 0.0, %v582
    %v584 = vpop.f32.mrf.mxu0
    %585 = vmatprep.mubr.f32.mxu0 0.0
    %586 = vmatmul.mubr.f32.gmra.mxu0 %v464
    %v587 = vpop.f32.mrf.mxu0
    %v588 = vadd.f32 0.0, %v587
    %v589 = vpop.f32.mrf.mxu0
    %590 = vmatprep.mubr.f32.mxu0 0.0
    %591 = vmatmul.mubr.f32.gmra.mxu0 %v467
    %v592 = vpop.f32.mrf.mxu0
    %v593 = vadd.f32 0.0, %v592
    %v594 = vpop.f32.mrf.mxu0
    %595 = vmatprep.mubr.f32.mxu0 0.0
    %596 = vmatmul.mubr.f32.gmra.mxu0 %v470
    %v597 = vpop.f32.mrf.mxu0
    %v598 = vadd.f32 0.0, %v597
    %v599 = vpop.f32.mrf.mxu0
    %600 = vmatprep.mubr.f32.mxu0 0.0
    %601 = vmatmul.mubr.f32.gmra.mxu0 %v473
    %v602 = vpop.f32.mrf.mxu0
    %v603 = vadd.f32 0.0, %v602
    %v604 = vpop.f32.mrf.mxu0
    %605 = vmatprep.mubr.f32.mxu0 0.0
    %606 = vmatmul.mubr.f32.gmra.mxu0 %v476
    %v607 = vpop.f32.mrf.mxu0
    %v608 = vadd.f32 0.0, %v607
    %v609 = vpop.f32.mrf.mxu0
    %610 = vmatprep.mubr.f32.mxu0 0.0
    %611 = vmatmul.mubr.f32.gmra.mxu0 %v479
    %v612 = vpop.f32.mrf.mxu0
    %v613 = vadd.f32 0.0, %v612
    %v614 = vpop.f32.mrf.mxu0
    %615 = vmatprep.mubr.f32.mxu0 0.0
    %616 = vmatmul.mubr.f32.gmra.mxu0 %v482
    %v617 = vpop.f32.mrf.mxu0
    %v618 = vadd.f32 0.0, %v617
    %v619 = vpop.f32.mrf.mxu0
    %620 = vmatprep.mubr.f32.mxu0 0.0
    %621 = vmatmul.mubr.f32.gmra.mxu0 %v485
    %v622 = vpop.f32.mrf.mxu0
    %v623 = vadd.f32 0.0, %v622
    %v624 = vpop.f32.mrf.mxu0
    %625 = vmatprep.mubr.f32.mxu0 0.0
    %626 = vmatmul.mubr.f32.gmra.mxu0 %v488
    %v627 = vpop.f32.mrf.mxu0
    %v628 = vadd.f32 0.0, %v627
    %v629 = vpop.f32.mrf.mxu0
    %630 = vmatprep.mubr.f32.mxu0 0.0
    %631 = vmatmul.mubr.f32.gmra.mxu0 %v491
    %v632 = vpop.f32.mrf.mxu0
    %v633 = vadd.f32 0.0, %v632
    %v634 = vpop.f32.mrf.mxu0
    %635 = vmatprep.mubr.f32.mxu0 0.0
    %636 = vmatmul.mubr.f32.gmra.mxu0 %v494
    %v637 = vpop.f32.mrf.mxu0
    %v638 = vadd.f32 0.0, %v637
    %v639 = vpop.f32.mrf.mxu0
    %640 = vdwg.mxu0
    %v641 = vld [vmem:[%s5] sm:$0x1]
    %v643 = vlaneseq
    %v644 = vshrl.u32 %v643, 7
    %v645 = vsub.s32 0, %v644
    %v646 = vrot.slane %v641, %v645
    %648 = vmatprep.subr.mxu0 0.0
    %649 = vmatpush1.msra.mxu0 %v638
    %650 = vmatprep.subr.mxu0 0.0
    %651 = vmatpush1.msra.mxu0 %v633
    %652 = vmatprep.subr.mxu0 0.0
    %653 = vmatpush1.msra.mxu0 %v628
    %654 = vmatprep.subr.mxu0 0.0
    %655 = vmatpush1.msra.mxu0 %v623
    %656 = vmatprep.subr.mxu0 0.0
    %657 = vmatpush1.msra.mxu0 %v618
    %658 = vmatprep.subr.mxu0 0.0
    %659 = vmatpush1.msra.mxu0 %v613
    %660 = vmatprep.subr.mxu0 0.0
    %661 = vmatpush1.msra.mxu0 %v608
    %662 = vmatprep.subr.mxu0 0.0
    %663 = vmatpush1.msra.mxu0 %v603
    %664 = vmatprep.subr.mxu0 0.0
    %665 = vmatpush1.msra.mxu0 %v598
    %666 = vmatprep.subr.mxu0 0.0
    %667 = vmatpush1.msra.mxu0 %v593
    %668 = vmatprep.subr.mxu0 0.0
    %669 = vmatpush1.msra.mxu0 %v588
    %670 = vmatprep.subr.mxu0 0.0
    %671 = vmatpush1.msra.mxu0 %v583
    %672 = vmatprep.subr.mxu0 0.0
    %673 = vmatpush1.msra.mxu0 %v578
    %674 = vmatprep.subr.mxu0 0.0
    %675 = vmatpush1.msra.mxu0 %v573
    %676 = vmatprep.subr.mxu0 0.0
    %677 = vmatpush1.msra.mxu0 %v568
    %678 = vmatprep.subr.mxu0 0.0
    %679 = vmatpush1.msra.mxu0 %v563
    %680 = vmatprep.subr.mxu0 0.0
    %681 = vmatpush2.msra.mxu0 0.0
    %682 = vmatprep.subr.mxu0 0.0
    %683 = vmatpush2.msra.mxu0 0.0
    %684 = vmatprep.subr.mxu0 0.0
    %685 = vmatpush2.msra.mxu0 0.0
    %686 = vmatprep.subr.mxu0 0.0
    %687 = vmatpush2.msra.mxu0 0.0
    %688 = vmatprep.subr.mxu0 0.0
    %689 = vmatpush2.msra.mxu0 0.0
    %690 = vmatprep.subr.mxu0 0.0
    %691 = vmatpush2.msra.mxu0 0.0
    %692 = vmatprep.subr.mxu0 0.0
    %693 = vmatpush2.msra.mxu0 0.0
    %694 = vmatprep.subr.mxu0 0.0
    %695 = vmatpush2.msra.mxu0 0.0
    %696 = vmatprep.subr.mxu0 0.0
    %697 = vmatpush2.msra.mxu0 0.0
    %698 = vmatprep.subr.mxu0 0.0
    %699 = vmatpush2.msra.mxu0 0.0
    %700 = vmatprep.subr.mxu0 0.0
    %701 = vmatpush2.msra.mxu0 0.0
    %702 = vmatprep.subr.mxu0 0.0
    %703 = vmatpush2.msra.mxu0 0.0
    %704 = vmatprep.subr.mxu0 0.0
    %705 = vmatpush2.msra.mxu0 0.0
    %706 = vmatprep.subr.mxu0 0.0
    %707 = vmatpush2.msra.mxu0 0.0
    %708 = vmatprep.subr.mxu0 0.0
    %709 = vmatpush2.msra.mxu0 0.0
    %710 = vmatprep.subr.mxu0 0.0
    %711 = vmatpush2.msra.mxu0 0.0
    %712 = vmatprep.mubr.f32.mxu0 0.0
    %713 = vmatmul.mubr.f32.gmra.mxu0 %v256
    %v714 = vpop.f32.mrf.mxu0
    %v715 = vadd.f32 %v646, %v714
    %v716 = vpop.f32.mrf.mxu0
    %717 = vmatprep.mubr.f32.mxu0 0.0
    %718 = vmatmul.mubr.f32.gmra.mxu0 %v257
    %v719 = vpop.f32.mrf.mxu0
    %v720 = vadd.f32 %v646, %v719
    %v721 = vpop.f32.mrf.mxu0
    %722 = vmatprep.mubr.f32.mxu0 0.0
    %723 = vmatmul.mubr.f32.gmra.mxu0 %v258
    %v724 = vpop.f32.mrf.mxu0
    %v725 = vadd.f32 %v646, %v724
    %v726 = vpop.f32.mrf.mxu0
    %727 = vmatprep.mubr.f32.mxu0 0.0
    %728 = vmatmul.mubr.f32.gmra.mxu0 %v259
    %v729 = vpop.f32.mrf.mxu0
    %v730 = vadd.f32 %v646, %v729
    %v731 = vpop.f32.mrf.mxu0
    %732 = vmatprep.mubr.f32.mxu0 0.0
    %733 = vmatmul.mubr.f32.gmra.mxu0 %v260
    %v734 = vpop.f32.mrf.mxu0
    %v735 = vadd.f32 %v646, %v734
    %v736 = vpop.f32.mrf.mxu0
    %737 = vmatprep.mubr.f32.mxu0 0.0
    %738 = vmatmul.mubr.f32.gmra.mxu0 %v261
    %v739 = vpop.f32.mrf.mxu0
    %v740 = vadd.f32 %v646, %v739
    %v741 = vpop.f32.mrf.mxu0
    %742 = vmatprep.mubr.f32.mxu0 0.0
    %743 = vmatmul.mubr.f32.gmra.mxu0 %v262
    %v744 = vpop.f32.mrf.mxu0
    %v745 = vadd.f32 %v646, %v744
    %v746 = vpop.f32.mrf.mxu0
    %747 = vmatprep.mubr.f32.mxu0 0.0
    %748 = vmatmul.mubr.f32.gmra.mxu0 %v263
    %v749 = vpop.f32.mrf.mxu0
    %v750 = vadd.f32 %v646, %v749
    %v751 = vpop.f32.mrf.mxu0
    %752 = vmatprep.mubr.f32.mxu0 0.0
    %753 = vmatmul.mubr.f32.gmra.mxu0 %v264
    %v754 = vpop.f32.mrf.mxu0
    %v755 = vadd.f32 %v646, %v754
    %v756 = vpop.f32.mrf.mxu0
    %757 = vmatprep.mubr.f32.mxu0 0.0
    %758 = vmatmul.mubr.f32.gmra.mxu0 %v265
    %v759 = vpop.f32.mrf.mxu0
    %v760 = vadd.f32 %v646, %v759
    %v761 = vpop.f32.mrf.mxu0
    %762 = vmatprep.mubr.f32.mxu0 0.0
    %763 = vmatmul.mubr.f32.gmra.mxu0 %v266
    %v764 = vpop.f32.mrf.mxu0
    %v765 = vadd.f32 %v646, %v764
    %v766 = vpop.f32.mrf.mxu0
    %767 = vmatprep.mubr.f32.mxu0 0.0
    %768 = vmatmul.mubr.f32.gmra.mxu0 %v267
    %v769 = vpop.f32.mrf.mxu0
    %v770 = vadd.f32 %v646, %v769
    %v771 = vpop.f32.mrf.mxu0
    %772 = vmatprep.mubr.f32.mxu0 0.0
    %773 = vmatmul.mubr.f32.gmra.mxu0 %v268
    %v774 = vpop.f32.mrf.mxu0
    %v775 = vadd.f32 %v646, %v774
    %v776 = vpop.f32.mrf.mxu0
    %777 = vmatprep.mubr.f32.mxu0 0.0
    %778 = vmatmul.mubr.f32.gmra.mxu0 %v269
    %v779 = vpop.f32.mrf.mxu0
    %v780 = vadd.f32 %v646, %v779
    %v781 = vpop.f32.mrf.mxu0
    %782 = vmatprep.mubr.f32.mxu0 0.0
    %783 = vmatmul.mubr.f32.gmra.mxu0 %v270
    %v784 = vpop.f32.mrf.mxu0
    %v785 = vadd.f32 %v646, %v784
    %v786 = vpop.f32.mrf.mxu0
    %787 = vmatprep.mubr.f32.mxu0 0.0
    %788 = vmatmul.mubr.f32.gmra.mxu0 %v271
    %v789 = vpop.f32.mrf.mxu0
    %v790 = vadd.f32 %v646, %v789
    %v791 = vpop.f32.mrf.mxu0
    %792 = vdwg.mxu0
    %793 = vst [vmem:[#allocation5] sm:$0xff] %v715
    %794 = vst [vmem:[#allocation5 + $0x8] sm:$0xff] %v720
    %795 = vst [vmem:[#allocation5 + $0x10] sm:$0xff] %v725
    %796 = vst [vmem:[#allocation5 + $0x18] sm:$0xff] %v730
    %797 = vst [vmem:[#allocation5 + $0x20] sm:$0xff] %v735
    %798 = vst [vmem:[#allocation5 + $0x28] sm:$0xff] %v740
    %799 = vst [vmem:[#allocation5 + $0x30] sm:$0xff] %v745
    %800 = vst [vmem:[#allocation5 + $0x38] sm:$0xff] %v750
    %801 = vst [vmem:[#allocation5 + $0x40] sm:$0xff] %v755
    %802 = vst [vmem:[#allocation5 + $0x48] sm:$0xff] %v760
    %803 = vst [vmem:[#allocation5 + $0x50] sm:$0xff] %v765
    %804 = vst [vmem:[#allocation5 + $0x58] sm:$0xff] %v770
    %805 = vst [vmem:[#allocation5 + $0x60] sm:$0xff] %v775
    %806 = vst [vmem:[#allocation5 + $0x68] sm:$0xff] %v780
    %807 = vst [vmem:[#allocation5 + $0x70] sm:$0xff] %v785
    %808 = vst [vmem:[#allocation5 + $0x78] sm:$0xff] %v790
    // Predicated region
    $region30: #{tpu_custom_call.1} parent=1 // pred_check
      _
    $region31: #{tpu_custom_call.1} parent=1 // pred_check_branch
      %810 = sbr.rel (0) target = $region33
    $region32: #{tpu_custom_call.1} parent=1 // pred_region
      %s812 = ssub.s32 2048, 2048
      %813 = vsyncadd [#allocation4], %s812
      %s814 = sshll.u32 [#allocation5], 4
      %s815 = int_to_ptr.vmem [resolvable:$true] %s814
      %820 = dma.vmem_to_hbm [thread:$0]  %s815, 2048, %s6, [#allocation4], 128, 128, 8
    $region33: #{tpu_custom_call.1} parent=1 // pred_fallthru
      _
    // Predicated region
    $region34: #{tpu_custom_call.1} parent=1 // pred_check
      _
    $region35: #{tpu_custom_call.1} parent=1 // pred_check_branch
      %822 = sbr.rel (0) target = $region37
    $region36: #{tpu_custom_call.1} parent=1 // pred_region
      %823 = dma.done [#allocation4], 2048
    $region37: #{tpu_custom_call.1} parent=1 // pred_fallthru
      _
    %824 = vsyncpa [#allocation3], 1
    %825 = vsyncpa [#allocation4], 1

</llo_original>
